<compile_context>
chip_gen: v7x
topology: tpu7x:2x2x1
jax: 0.10.0
libtpu: 0.0.40
codegen_flags: <defaults>
</compile_context>

<pallas_src>
import functools

import jax
import jax.numpy as jnp
from jax.experimental import pallas as pl
from jax.experimental.pallas import tpu as pltpu

BN_EPS = 1e-05


def _sigmoid_eup(x):
    # exp (EUP) + approximate reciprocal (EUP) instead of a VPU divide.
    return pl.reciprocal(1.0 + jnp.exp(-x), approx=True)


def _attention_kernel(x_ref, w1_ref, g1_ref, b1_ref, w2_ref, g2_ref, b2_ref, o_ref):
    x = x_ref[...].astype(jnp.float32)

    # ---- Linear(D -> H, bias=False): bf16 MXU operands, f32 accumulation ----
    h = jnp.dot(x.astype(jnp.bfloat16), w1_ref[...],
                preferred_element_type=jnp.float32)

    # ---- BatchNorm1d(H), batch statistics, folded into one scale/shift FMA ----
    mean1 = jnp.mean(h, axis=0, keepdims=True)
    c1 = h - mean1
    var1 = jnp.mean(c1 * c1, axis=0, keepdims=True)          # biased variance
    scale1 = g1_ref[...] * jax.lax.rsqrt(var1 + BN_EPS)
    shift1 = b1_ref[...] - mean1 * scale1
    h = h * scale1 + shift1

    # ---- MemoryEfficientSwish: h * sigmoid(h) ----
    h = h * _sigmoid_eup(h)

    # ---- Linear(H -> D, bias=False): bf16 MXU operands, f32 accumulation ----
    a = jnp.dot(h.astype(jnp.bfloat16), w2_ref[...],
                preferred_element_type=jnp.float32)

    # ---- BatchNorm1d(D), batch statistics, folded scale/shift ----
    mean2 = jnp.mean(a, axis=0, keepdims=True)
    c2 = a - mean2
    var2 = jnp.mean(c2 * c2, axis=0, keepdims=True)
    scale2 = g2_ref[...] * jax.lax.rsqrt(var2 + BN_EPS)
    shift2 = b2_ref[...] - mean2 * scale2
    a = a * scale2 + shift2

    # ---- Sigmoid gate, elementwise modulation of the (full-precision) input ----
    o_ref[...] = (x * _sigmoid_eup(a)).astype(o_ref.dtype)


@functools.partial(jax.jit, static_argnames=())
def attention_forward(x, w1, g1, b1, w2, g2, b2):
    # BatchNorm needs whole-batch statistics, so this grid-less, whole-array-in-VMEM
    # design is used; it is VMEM-safe for small/medium batches (residency at B=8,
    # D=512 is well under 1 MiB). No custom vmem_limit_bytes: default scoped VMEM
    # is ample and oversizing it starves the compiler on v7x (64 MiB total VMEM).
    # TODO(synk): for very large B, switch to a batch-tiled two-phase (stats -> normalize)
    # pipeline with a "parallel" batch grid axis so v7x's second TensorCore is used.
    B, D = x.shape
    vmem_spec = pl.BlockSpec(memory_space=pltpu.MemorySpace.VMEM)
    return pl.pallas_call(
        _attention_kernel,
        out_shape=jax.ShapeDtypeStruct((B, D), x.dtype),
        in_specs=[vmem_spec] * 7,
        out_specs=vmem_spec,
    )(x, w1, g1, b1, w2, g2, b2)


def make_params(key, input_dim=512, output_dim=512):
    hidden = output_dim // 4
    k1, k2, k3, k4, k5, k6 = jax.random.split(key, 6)
    # Linear weights stored as (in, out) — transposed relative to PyTorch (out, in) —
    # and kept bf16 at rest (MXU operands; f32 accumulation in-kernel).
    w1 = (jax.random.normal(k1, (input_dim, hidden), jnp.float32)
          * (1.0 / jnp.sqrt(input_dim))).astype(jnp.bfloat16)
    w2 = (jax.random.normal(k2, (hidden, output_dim), jnp.float32)
          * (1.0 / jnp.sqrt(hidden))).astype(jnp.bfloat16)
    # BatchNorm affine params (gamma, beta): f32, kept 2D (1, C) for lane-friendly broadcast.
    g1 = 1.0 + 0.1 * jax.random.normal(k3, (1, hidden), jnp.float32)
    b1 = 0.1 * jax.random.normal(k4, (1, hidden), jnp.float32)
    g2 = 1.0 + 0.1 * jax.random.normal(k5, (1, output_dim), jnp.float32)
    b2 = 0.1 * jax.random.normal(k6, (1, output_dim), jnp.float32)
    return w1, g1, b1, w2, g2, b2


if __name__ == "__main__":
    key = jax.random.PRNGKey(0)
    kx, kp = jax.random.split(key)

    B, D = 8, 512  # batch, feature dim (module default input_dim=output_dim=512)
    x = jax.random.normal(kx, (B, D), jnp.float32)
    params = make_params(kp, input_dim=D, output_dim=D)

    out = attention_forward(x, *params)
    jax.block_until_ready(out)

    assert out.shape == (B, D) and out.dtype == jnp.float32
    assert bool(jnp.all(jnp.isfinite(out)))
    print("KERNEL_OK")
</pallas_src>

<mosaic_0001>
module attributes {stable_mosaic.version = 11 : i64} {
  func.func @_attention_kernel(%arg0: memref<8x512xf32, #tpu.memory_space<vmem>>, %arg1: memref<512x128xbf16, #tpu.memory_space<vmem>>, %arg2: memref<1x128xf32, #tpu.memory_space<vmem>>, %arg3: memref<1x128xf32, #tpu.memory_space<vmem>>, %arg4: memref<128x512xbf16, #tpu.memory_space<vmem>>, %arg5: memref<1x512xf32, #tpu.memory_space<vmem>>, %arg6: memref<1x512xf32, #tpu.memory_space<vmem>>, %arg7: memref<8x512xf32, #tpu.memory_space<vmem>>) attributes {dimension_semantics = [], scalar_prefetch = 0 : i64, scratch_operands = 0 : i64, tpu.core_type = #tpu.core_type<tc>} {
    %c0 = arith.constant 0 : index
    %c0_0 = arith.constant 0 : index
    %0 = vector.load %arg0[%c0, %c0_0] : memref<8x512xf32, #tpu.memory_space<vmem>>, vector<8x512xf32>
    %1 = arith.truncf %0 : vector<8x512xf32> to vector<8x512xbf16>
    %c0_1 = arith.constant 0 : index
    %c0_2 = arith.constant 0 : index
    %2 = vector.load %arg1[%c0_1, %c0_2] : memref<512x128xbf16, #tpu.memory_space<vmem>>, vector<512x128xbf16>
    %cst = arith.constant dense<0.000000e+00> : vector<8x128xf32>
    %3 = tpu.matmul %1, %2, %cst {dimension_numbers = #tpu.dot_dimension_numbers<[1], [0], [0], [1], [0, 0, 1, 1], [], []>} : vector<8x512xbf16>, vector<512x128xbf16>, vector<8x128xf32> -> vector<8x128xf32>
    %cst_3 = arith.constant dense<0.000000e+00> : vector<128xf32>
    %4 = vector.multi_reduction <add>, %3, %cst_3 [0] : vector<8x128xf32> to vector<128xf32>
    %5 = vector.shape_cast %4 : vector<128xf32> to vector<1x128xf32>
    %cst_4 = arith.constant 8.000000e+00 : f32
    %6 = vector.broadcast %cst_4 : f32 to vector<1x128xf32>
    %7 = arith.divf %5, %6 : vector<1x128xf32>
    %8 = vector.broadcast %7 : vector<1x128xf32> to vector<8x128xf32>
    %9 = arith.subf %3, %8 : vector<8x128xf32>
    %10 = arith.mulf %9, %9 : vector<8x128xf32>
    %cst_5 = arith.constant dense<0.000000e+00> : vector<128xf32>
    %11 = vector.multi_reduction <add>, %10, %cst_5 [0] : vector<8x128xf32> to vector<128xf32>
    %12 = vector.shape_cast %11 : vector<128xf32> to vector<1x128xf32>
    %cst_6 = arith.constant 8.000000e+00 : f32
    %13 = vector.broadcast %cst_6 : f32 to vector<1x128xf32>
    %14 = arith.divf %12, %13 : vector<1x128xf32>
    %c0_7 = arith.constant 0 : index
    %c0_8 = arith.constant 0 : index
    %15 = vector.load %arg2[%c0_7, %c0_8] : memref<1x128xf32, #tpu.memory_space<vmem>>, vector<1x128xf32>
    %cst_9 = arith.constant 9.99999974E-6 : f32
    %16 = vector.broadcast %cst_9 : f32 to vector<1x128xf32>
    %17 = arith.addf %14, %16 : vector<1x128xf32>
    %18 = math.rsqrt %17 : vector<1x128xf32>
    %19 = arith.mulf %15, %18 : vector<1x128xf32>
    %c0_10 = arith.constant 0 : index
    %c0_11 = arith.constant 0 : index
    %20 = vector.load %arg3[%c0_10, %c0_11] : memref<1x128xf32, #tpu.memory_space<vmem>>, vector<1x128xf32>
    %21 = arith.mulf %7, %19 : vector<1x128xf32>
    %22 = arith.subf %20, %21 : vector<1x128xf32>
    %23 = vector.broadcast %19 : vector<1x128xf32> to vector<8x128xf32>
    %24 = arith.mulf %3, %23 : vector<8x128xf32>
    %25 = vector.broadcast %22 : vector<1x128xf32> to vector<8x128xf32>
    %26 = arith.addf %24, %25 : vector<8x128xf32>
    %cst_12 = arith.constant 0.000000e+00 : f32
    %27 = vector.broadcast %cst_12 : f32 to vector<8x128xf32>
    %28 = arith.subf %27, %26 : vector<8x128xf32>
    %29 = math.exp %28 : vector<8x128xf32>
    %cst_13 = arith.constant 1.000000e+00 : f32
    %30 = vector.broadcast %cst_13 : f32 to vector<8x128xf32>
    %31 = arith.addf %30, %29 : vector<8x128xf32>
    %32 = tpu.reciprocal %31 {approx = true} : vector<8x128xf32> -> vector<8x128xf32>
    %33 = arith.mulf %26, %32 : vector<8x128xf32>
    %34 = arith.truncf %33 : vector<8x128xf32> to vector<8x128xbf16>
    %c0_14 = arith.constant 0 : index
    %c0_15 = arith.constant 0 : index
    %35 = vector.load %arg4[%c0_14, %c0_15] : memref<128x512xbf16, #tpu.memory_space<vmem>>, vector<128x512xbf16>
    %cst_16 = arith.constant dense<0.000000e+00> : vector<8x512xf32>
    %36 = tpu.matmul %34, %35, %cst_16 {dimension_numbers = #tpu.dot_dimension_numbers<[1], [0], [0], [1], [0, 0, 1, 1], [], []>} : vector<8x128xbf16>, vector<128x512xbf16>, vector<8x512xf32> -> vector<8x512xf32>
    %cst_17 = arith.constant dense<0.000000e+00> : vector<512xf32>
    %37 = vector.multi_reduction <add>, %36, %cst_17 [0] : vector<8x512xf32> to vector<512xf32>
    %38 = vector.shape_cast %37 : vector<512xf32> to vector<1x512xf32>
    %cst_18 = arith.constant 8.000000e+00 : f32
    %39 = vector.broadcast %cst_18 : f32 to vector<1x512xf32>
    %40 = arith.divf %38, %39 : vector<1x512xf32>
    %41 = vector.broadcast %40 : vector<1x512xf32> to vector<8x512xf32>
    %42 = arith.subf %36, %41 : vector<8x512xf32>
    %43 = arith.mulf %42, %42 : vector<8x512xf32>
    %cst_19 = arith.constant dense<0.000000e+00> : vector<512xf32>
    %44 = vector.multi_reduction <add>, %43, %cst_19 [0] : vector<8x512xf32> to vector<512xf32>
    %45 = vector.shape_cast %44 : vector<512xf32> to vector<1x512xf32>
    %cst_20 = arith.constant 8.000000e+00 : f32
    %46 = vector.broadcast %cst_20 : f32 to vector<1x512xf32>
    %47 = arith.divf %45, %46 : vector<1x512xf32>
    %c0_21 = arith.constant 0 : index
    %c0_22 = arith.constant 0 : index
    %48 = vector.load %arg5[%c0_21, %c0_22] : memref<1x512xf32, #tpu.memory_space<vmem>>, vector<1x512xf32>
    %cst_23 = arith.constant 9.99999974E-6 : f32
    %49 = vector.broadcast %cst_23 : f32 to vector<1x512xf32>
    %50 = arith.addf %47, %49 : vector<1x512xf32>
    %51 = math.rsqrt %50 : vector<1x512xf32>
    %52 = arith.mulf %48, %51 : vector<1x512xf32>
    %c0_24 = arith.constant 0 : index
    %c0_25 = arith.constant 0 : index
    %53 = vector.load %arg6[%c0_24, %c0_25] : memref<1x512xf32, #tpu.memory_space<vmem>>, vector<1x512xf32>
    %54 = arith.mulf %40, %52 : vector<1x512xf32>
    %55 = arith.subf %53, %54 : vector<1x512xf32>
    %56 = vector.broadcast %52 : vector<1x512xf32> to vector<8x512xf32>
    %57 = arith.mulf %36, %56 : vector<8x512xf32>
    %58 = vector.broadcast %55 : vector<1x512xf32> to vector<8x512xf32>
    %59 = arith.addf %57, %58 : vector<8x512xf32>
    %cst_26 = arith.constant 0.000000e+00 : f32
    %60 = vector.broadcast %cst_26 : f32 to vector<8x512xf32>
    %61 = arith.subf %60, %59 : vector<8x512xf32>
    %62 = math.exp %61 : vector<8x512xf32>
    %cst_27 = arith.constant 1.000000e+00 : f32
    %63 = vector.broadcast %cst_27 : f32 to vector<8x512xf32>
    %64 = arith.addf %63, %62 : vector<8x512xf32>
    %65 = tpu.reciprocal %64 {approx = true} : vector<8x512xf32> -> vector<8x512xf32>
    %66 = arith.mulf %0, %65 : vector<8x512xf32>
    %c0_28 = arith.constant 0 : index
    %c0_29 = arith.constant 0 : index
    %67 = vector.load %arg7[%c0_28, %c0_29] : memref<8x512xf32, #tpu.memory_space<vmem>>, vector<8x512xf32>
    tpu.vector_store %arg7[%c0_28, %c0_29], %66 {strides = array<i32>} : memref<8x512xf32, #tpu.memory_space<vmem>>, vector<8x512xf32>,
    return
  }
}

</mosaic_0001>

<llo_original>
// kernel: attention_forward.1
$region0: #{attention_forward.1}
  #allocation0 [shape = 'u32[]', space=smem, size = 0x4, offset = 0x4, fixed_abs, tag = 'smem constant byte address 0x4 - core index']
  #allocation1 [shape = 'u32[144,128]{1,0:T(1,128)}', space=vmem, size = 0x12000, scoped, tag = 'internal scratch']
  %s0 = inlined_call_operand.hbm [shape: f32[8,512], index: 0, kind: input, shape index: {}]
  %s1 = inlined_call_operand.hbm [shape: bf16[512,128], index: 1, kind: input, shape index: {}]
  %s2 = inlined_call_operand.vmem [shape: f32[1,128], index: 2, kind: input, shape index: {}]
  %s3 = inlined_call_operand.vmem [shape: f32[1,128], index: 3, kind: input, shape index: {}]
  %s4 = inlined_call_operand.hbm [shape: bf16[128,512], index: 4, kind: input, shape index: {}]
  %s5 = inlined_call_operand.vmem [shape: f32[1,512], index: 5, kind: input, shape index: {}]
  %s6 = inlined_call_operand.vmem [shape: f32[1,512], index: 6, kind: input, shape index: {}]
  %s7 = inlined_call_operand.hbm [shape: f32[8,512], index: 7, kind: output, shape index: {}]
  %s8 = sld [smem:[#allocation0]]
  $region50: #{attention_forward.1} parent=0
    _
  %s10 = ssub.s32 1, %s8
  %s11 = scalar_select 0, %s10, %s8
  $region1: #{attention_forward.1} parent=0
    #allocation2 [shape = 'u8[16384]{0}', space=vmem, size = 0x4000, scoped, tag = 'input window, operand 0, single buffered']
    #allocation3 [shape = 's32[1]{0}', space=sflag, size = 0x4, scoped, tag = 'scoped memory for attention_forward.1']
    #allocation4 [shape = 's32[1]{0}', space=sflag, size = 0x4, scoped, tag = 'scoped memory for attention_forward.1']
    #allocation5 [shape = 'u8[131072]{0}', space=vmem, size = 0x20000, scoped, tag = 'input window, operand 1, single buffered']
    #allocation6 [shape = 's32[1]{0}', space=sflag, size = 0x4, scoped, tag = 'scoped memory for attention_forward.1']
    #allocation7 [shape = 'u8[131072]{0}', space=vmem, size = 0x20000, scoped, tag = 'input window, operand 4, single buffered']
    #allocation8 [shape = 'u8[16384]{0}', space=vmem, size = 0x4000, scoped, tag = 'output window, operand 0, single buffered']
    %12 = vsyncpa [#allocation3], 0
    %13 = vsyncpa [#allocation6], 0
    %14 = vsyncpa [#allocation4], 0
    // Predicated region
    $region2: #{attention_forward.1} parent=1 // pred_check
      _
    $region3: #{attention_forward.1} parent=1 // pred_check_branch
      %16 = sbr.rel (0) target = $region5
    $region4: #{attention_forward.1} parent=1 // pred_region
      %s18 = ssub.s32 512, 512
      %19 = vsyncadd [#allocation3], %s18
      %s21 = sshll.u32 [#allocation2], 4
      %s22 = int_to_ptr.vmem [resolvable:$true] %s21
      %24 = dma.hbm_to_vmem [thread:$0]  %s0, 512, %s22, [#allocation3]
    $region5: #{attention_forward.1} parent=1 // pred_fallthru
      _
    // Predicated region
    $region6: #{attention_forward.1} parent=1 // pred_check
      _
    $region7: #{attention_forward.1} parent=1 // pred_check_branch
      %26 = sbr.rel (0) target = $region9
    $region8: #{attention_forward.1} parent=1 // pred_region
      %s28 = ssub.s32 4096, 4096
      %29 = vsyncadd [#allocation6], %s28
      %s30 = sshll.u32 [#allocation5], 4
      %s31 = int_to_ptr.vmem [resolvable:$true] %s30
      %36 = dma.hbm_to_vmem [thread:$0]  %s1, 4096, %s31, [#allocation6], 64, 64, 4
    $region9: #{attention_forward.1} parent=1 // pred_fallthru
      _
    // Predicated region
    $region10: #{attention_forward.1} parent=1 // pred_check
      _
    $region11: #{attention_forward.1} parent=1 // pred_check_branch
      %38 = sbr.rel (0) target = $region13
    $region12: #{attention_forward.1} parent=1 // pred_region
      _
    $region13: #{attention_forward.1} parent=1 // pred_fallthru
      _
    // Predicated region
    $region14: #{attention_forward.1} parent=1 // pred_check
      _
    $region15: #{attention_forward.1} parent=1 // pred_check_branch
      %40 = sbr.rel (0) target = $region17
    $region16: #{attention_forward.1} parent=1 // pred_region
      _
    $region17: #{attention_forward.1} parent=1 // pred_fallthru
      _
    // Predicated region
    $region18: #{attention_forward.1} parent=1 // pred_check
      _
    $region19: #{attention_forward.1} parent=1 // pred_check_branch
      %42 = sbr.rel (0) target = $region21
    $region20: #{attention_forward.1} parent=1 // pred_region
      %s44 = ssub.s32 4096, 4096
      %45 = vsyncadd [#allocation6], %s44
      %s46 = sshll.u32 [#allocation7], 4
      %s47 = int_to_ptr.vmem [resolvable:$true] %s46
      %52 = dma.hbm_to_vmem [thread:$0]  %s4, 4096, %s47, [#allocation6], 256, 256, 16
    $region21: #{attention_forward.1} parent=1 // pred_fallthru
      _
    // Predicated region
    $region22: #{attention_forward.1} parent=1 // pred_check
      _
    $region23: #{attention_forward.1} parent=1 // pred_check_branch
      %54 = sbr.rel (0) target = $region25
    $region24: #{attention_forward.1} parent=1 // pred_region
      _
    $region25: #{attention_forward.1} parent=1 // pred_fallthru
      _
    // Predicated region
    $region26: #{attention_forward.1} parent=1 // pred_check
      _
    $region27: #{attention_forward.1} parent=1 // pred_check_branch
      %56 = sbr.rel (0) target = $region29
    $region28: #{attention_forward.1} parent=1 // pred_region
      _
    $region29: #{attention_forward.1} parent=1 // pred_fallthru
      _
    // Predicated region
    $region30: #{attention_forward.1} parent=1 // pred_check
      _
    $region31: #{attention_forward.1} parent=1 // pred_check_branch
      %58 = sbr.rel (0) target = $region33
    $region32: #{attention_forward.1} parent=1 // pred_region
      %59 = dma.done [#allocation3], 512
    $region33: #{attention_forward.1} parent=1 // pred_fallthru
      _
    // Predicated region
    $region34: #{attention_forward.1} parent=1 // pred_check
      _
    $region35: #{attention_forward.1} parent=1 // pred_check_branch
      %61 = sbr.rel (0) target = $region37
    $region36: #{attention_forward.1} parent=1 // pred_region
      %62 = dma.done [#allocation6], 4096
    $region37: #{attention_forward.1} parent=1 // pred_fallthru
      _
    // Predicated region
    $region38: #{attention_forward.1} parent=1 // pred_check
      _
    $region39: #{attention_forward.1} parent=1 // pred_check_branch
      %64 = sbr.rel (0) target = $region41
    $region40: #{attention_forward.1} parent=1 // pred_region
      %65 = dma.done [#allocation6], 4096
    $region41: #{attention_forward.1} parent=1 // pred_fallthru
      _
    %v67 = vld [vmem:[#allocation2] sm:$0xff]
    %v68 = vld [vmem:[#allocation2 + $0x8] sm:$0xff]
    %v69 = vld [vmem:[#allocation2 + $0x10] sm:$0xff]
    %v70 = vld [vmem:[#allocation2 + $0x18] sm:$0xff]
    %v71 = vpack.c.bf16 %v67, %v67
    %v72 = vpack.c.bf16 %v68, %v68
    %v73 = vpack.c.bf16 %v69, %v69
    %v74 = vpack.c.bf16 %v70, %v70
    %v75 = vld [vmem:[#allocation5] sm:$0xf]
    %v76 = vld [vmem:[#allocation5 + $0x4] sm:$0xf]
    %v77 = vld [vmem:[#allocation5 + $0x8] sm:$0xf]
    %v78 = vld [vmem:[#allocation5 + $0xc] sm:$0xf]
    %v79 = vld [vmem:[#allocation5 + $0x10] sm:$0xf]
    %v80 = vld [vmem:[#allocation5 + $0x14] sm:$0xf]
    %v81 = vld [vmem:[#allocation5 + $0x18] sm:$0xf]
    %v82 = vld [vmem:[#allocation5 + $0x1c] sm:$0xf]
    %v83 = vld [vmem:[#allocation5 + $0x20] sm:$0xf]
    %v84 = vld [vmem:[#allocation5 + $0x24] sm:$0xf]
    %v85 = vld [vmem:[#allocation5 + $0x28] sm:$0xf]
    %v86 = vld [vmem:[#allocation5 + $0x2c] sm:$0xf]
    %v87 = vld [vmem:[#allocation5 + $0x30] sm:$0xf]
    %v88 = vld [vmem:[#allocation5 + $0x34] sm:$0xf]
    %v89 = vld [vmem:[#allocation5 + $0x38] sm:$0xf]
    %v90 = vld [vmem:[#allocation5 + $0x3c] sm:$0xf]
    %v91 = vld [vmem:[#allocation5 + $0x40] sm:$0xf]
    %v92 = vld [vmem:[#allocation5 + $0x44] sm:$0xf]
    %v93 = vld [vmem:[#allocation5 + $0x48] sm:$0xf]
    %v94 = vld [vmem:[#allocation5 + $0x4c] sm:$0xf]
    %v95 = vld [vmem:[#allocation5 + $0x50] sm:$0xf]
    %v96 = vld [vmem:[#allocation5 + $0x54] sm:$0xf]
    %v97 = vld [vmem:[#allocation5 + $0x58] sm:$0xf]
    %v98 = vld [vmem:[#allocation5 + $0x5c] sm:$0xf]
    %v99 = vld [vmem:[#allocation5 + $0x60] sm:$0xf]
    %v100 = vld [vmem:[#allocation5 + $0x64] sm:$0xf]
    %v101 = vld [vmem:[#allocation5 + $0x68] sm:$0xf]
    %v102 = vld [vmem:[#allocation5 + $0x6c] sm:$0xf]
    %v103 = vld [vmem:[#allocation5 + $0x70] sm:$0xf]
    %v104 = vld [vmem:[#allocation5 + $0x74] sm:$0xf]
    %v105 = vld [vmem:[#allocation5 + $0x78] sm:$0xf]
    %v106 = vld [vmem:[#allocation5 + $0x7c] sm:$0xf]
    %v107 = vld [vmem:[#allocation5 + $0x80] sm:$0xf]
    %v108 = vld [vmem:[#allocation5 + $0x84] sm:$0xf]
    %v109 = vld [vmem:[#allocation5 + $0x88] sm:$0xf]
    %v110 = vld [vmem:[#allocation5 + $0x8c] sm:$0xf]
    %v111 = vld [vmem:[#allocation5 + $0x90] sm:$0xf]
    %v112 = vld [vmem:[#allocation5 + $0x94] sm:$0xf]
    %v113 = vld [vmem:[#allocation5 + $0x98] sm:$0xf]
    %v114 = vld [vmem:[#allocation5 + $0x9c] sm:$0xf]
    %v115 = vld [vmem:[#allocation5 + $0xa0] sm:$0xf]
    %v116 = vld [vmem:[#allocation5 + $0xa4] sm:$0xf]
    %v117 = vld [vmem:[#allocation5 + $0xa8] sm:$0xf]
    %v118 = vld [vmem:[#allocation5 + $0xac] sm:$0xf]
    %v119 = vld [vmem:[#allocation5 + $0xb0] sm:$0xf]
    %v120 = vld [vmem:[#allocation5 + $0xb4] sm:$0xf]
    %v121 = vld [vmem:[#allocation5 + $0xb8] sm:$0xf]
    %v122 = vld [vmem:[#allocation5 + $0xbc] sm:$0xf]
    %v123 = vld [vmem:[#allocation5 + $0xc0] sm:$0xf]
    %v124 = vld [vmem:[#allocation5 + $0xc4] sm:$0xf]
    %v125 = vld [vmem:[#allocation5 + $0xc8] sm:$0xf]
    %v126 = vld [vmem:[#allocation5 + $0xcc] sm:$0xf]
    %v127 = vld [vmem:[#allocation5 + $0xd0] sm:$0xf]
    %v128 = vld [vmem:[#allocation5 + $0xd4] sm:$0xf]
    %v129 = vld [vmem:[#allocation5 + $0xd8] sm:$0xf]
    %v130 = vld [vmem:[#allocation5 + $0xdc] sm:$0xf]
    %v131 = vld [vmem:[#allocation5 + $0xe0] sm:$0xf]
    %v132 = vld [vmem:[#allocation5 + $0xe4] sm:$0xf]
    %v133 = vld [vmem:[#allocation5 + $0xe8] sm:$0xf]
    %v134 = vld [vmem:[#allocation5 + $0xec] sm:$0xf]
    %v135 = vld [vmem:[#allocation5 + $0xf0] sm:$0xf]
    %v136 = vld [vmem:[#allocation5 + $0xf4] sm:$0xf]
    %v137 = vld [vmem:[#allocation5 + $0xf8] sm:$0xf]
    %v138 = vld [vmem:[#allocation5 + $0xfc] sm:$0xf]
    %v203 = vunpack.c.l.b16 %v75
    %v204 = vunpack.c.l.b16 %v76
    %v205 = vunpack.c.l.b16 %v77
    %v206 = vunpack.c.l.b16 %v78
    %v207 = vunpack.c.l.b16 %v79
    %v208 = vunpack.c.l.b16 %v80
    %v209 = vunpack.c.l.b16 %v81
    %v210 = vunpack.c.l.b16 %v82
    %v211 = vunpack.c.l.b16 %v83
    %v212 = vunpack.c.l.b16 %v84
    %v213 = vunpack.c.l.b16 %v85
    %v214 = vunpack.c.l.b16 %v86
    %v215 = vunpack.c.l.b16 %v87
    %v216 = vunpack.c.l.b16 %v88
    %v217 = vunpack.c.l.b16 %v89
    %v218 = vunpack.c.l.b16 %v90
    %v219 = vunpack.c.l.b16 %v91
    %v220 = vunpack.c.l.b16 %v92
    %v221 = vunpack.c.l.b16 %v93
    %v222 = vunpack.c.l.b16 %v94
    %v223 = vunpack.c.l.b16 %v95
    %v224 = vunpack.c.l.b16 %v96
    %v225 = vunpack.c.l.b16 %v97
    %v226 = vunpack.c.l.b16 %v98
    %v227 = vunpack.c.l.b16 %v99
    %v228 = vunpack.c.l.b16 %v100
    %v229 = vunpack.c.l.b16 %v101
    %v230 = vunpack.c.l.b16 %v102
    %v231 = vunpack.c.l.b16 %v103
    %v232 = vunpack.c.l.b16 %v104
    %v233 = vunpack.c.l.b16 %v105
    %v234 = vunpack.c.l.b16 %v106
    %v235 = vunpack.c.l.b16 %v107
    %v236 = vunpack.c.l.b16 %v108
    %v237 = vunpack.c.l.b16 %v109
    %v238 = vunpack.c.l.b16 %v110
    %v239 = vunpack.c.l.b16 %v111
    %v240 = vunpack.c.l.b16 %v112
    %v241 = vunpack.c.l.b16 %v113
    %v242 = vunpack.c.l.b16 %v114
    %v243 = vunpack.c.l.b16 %v115
    %v244 = vunpack.c.l.b16 %v116
    %v245 = vunpack.c.l.b16 %v117
    %v246 = vunpack.c.l.b16 %v118
    %v247 = vunpack.c.l.b16 %v119
    %v248 = vunpack.c.l.b16 %v120
    %v249 = vunpack.c.l.b16 %v121
    %v250 = vunpack.c.l.b16 %v122
    %v251 = vunpack.c.l.b16 %v123
    %v252 = vunpack.c.l.b16 %v124
    %v253 = vunpack.c.l.b16 %v125
    %v254 = vunpack.c.l.b16 %v126
    %v255 = vunpack.c.l.b16 %v127
    %v256 = vunpack.c.l.b16 %v128
    %v257 = vunpack.c.l.b16 %v129
    %v258 = vunpack.c.l.b16 %v130
    %v259 = vunpack.c.l.b16 %v131
    %v260 = vunpack.c.l.b16 %v132
    %v261 = vunpack.c.l.b16 %v133
    %v262 = vunpack.c.l.b16 %v134
    %v263 = vunpack.c.l.b16 %v135
    %v264 = vunpack.c.l.b16 %v136
    %v265 = vunpack.c.l.b16 %v137
    %v266 = vunpack.c.l.b16 %v138
    %v267 = vpack.c.b16 %v204, %v203
    %v268 = vpack.c.b16 %v206, %v205
    %v269 = vpack.c.b16 %v208, %v207
    %v270 = vpack.c.b16 %v210, %v209
    %v271 = vpack.c.b16 %v212, %v211
    %v272 = vpack.c.b16 %v214, %v213
    %v273 = vpack.c.b16 %v216, %v215
    %v274 = vpack.c.b16 %v218, %v217
    %v275 = vpack.c.b16 %v220, %v219
    %v276 = vpack.c.b16 %v222, %v221
    %v277 = vpack.c.b16 %v224, %v223
    %v278 = vpack.c.b16 %v226, %v225
    %v279 = vpack.c.b16 %v228, %v227
    %v280 = vpack.c.b16 %v230, %v229
    %v281 = vpack.c.b16 %v232, %v231
    %v282 = vpack.c.b16 %v234, %v233
    %v283 = vpack.c.b16 %v236, %v235
    %v284 = vpack.c.b16 %v238, %v237
    %v285 = vpack.c.b16 %v240, %v239
    %v286 = vpack.c.b16 %v242, %v241
    %v287 = vpack.c.b16 %v244, %v243
    %v288 = vpack.c.b16 %v246, %v245
    %v289 = vpack.c.b16 %v248, %v247
    %v290 = vpack.c.b16 %v250, %v249
    %v291 = vpack.c.b16 %v252, %v251
    %v292 = vpack.c.b16 %v254, %v253
    %v293 = vpack.c.b16 %v256, %v255
    %v294 = vpack.c.b16 %v258, %v257
    %v295 = vpack.c.b16 %v260, %v259
    %v296 = vpack.c.b16 %v262, %v261
    %v297 = vpack.c.b16 %v264, %v263
    %v298 = vpack.c.b16 %v266, %v265
    %331 = vmatprep.subr.bf16.mxu0 0
    %332 = vmatpush1.bf16.msra.mxu0 %v267
    %333 = vmatprep.subr.bf16.mxu0 0
    %334 = vmatpush1.bf16.msra.mxu0 %v268
    %335 = vmatprep.subr.bf16.mxu0 0
    %336 = vmatpush1.bf16.msra.mxu0 %v269
    %337 = vmatprep.subr.bf16.mxu0 0
    %338 = vmatpush1.bf16.msra.mxu0 %v270
    %339 = vmatprep.subr.bf16.mxu0 0
    %340 = vmatpush1.bf16.msra.mxu0 %v271
    %341 = vmatprep.subr.bf16.mxu0 0
    %342 = vmatpush1.bf16.msra.mxu0 %v272
    %343 = vmatprep.subr.bf16.mxu0 0
    %344 = vmatpush1.bf16.msra.mxu0 %v273
    %345 = vmatprep.subr.bf16.mxu0 0
    %346 = vmatpush1.bf16.msra.mxu0 %v274
    %347 = vmatprep.subr.bf16.mxu0 0
    %348 = vmatpush1.bf16.msra.mxu0 %v275
    %349 = vmatprep.subr.bf16.mxu0 0
    %350 = vmatpush1.bf16.msra.mxu0 %v276
    %351 = vmatprep.subr.bf16.mxu0 0
    %352 = vmatpush1.bf16.msra.mxu0 %v277
    %353 = vmatprep.subr.bf16.mxu0 0
    %354 = vmatpush1.bf16.msra.mxu0 %v278
    %355 = vmatprep.subr.bf16.mxu0 0
    %356 = vmatpush1.bf16.msra.mxu0 %v279
    %357 = vmatprep.subr.bf16.mxu0 0
    %358 = vmatpush1.bf16.msra.mxu0 %v280
    %359 = vmatprep.subr.bf16.mxu0 0
    %360 = vmatpush1.bf16.msra.mxu0 %v281
    %361 = vmatprep.subr.bf16.mxu0 0
    %362 = vmatpush1.bf16.msra.mxu0 %v282
    %363 = vmatprep.mubr.bf16.mxu0 %v72
    %364 = vmatmul.mubr.bf16.gmra.mrb[0].mxu0 %v71
    %v365 = vpop.f32.mrb[0].mxu0
    %v366 = vadd.f32 0.0, %v365
    %v367 = vpop.f32.mrb[0].mxu0
    %v368 = vpop.f32.mrb[0].mxu0
    %v369 = vpop.f32.mrb[0].mxu0
    %370 = vdwg.mxu0
    %371 = vmatprep.subr.bf16.mxu0 0
    %372 = vmatpush1.bf16.msra.mxu0 %v283
    %373 = vmatprep.subr.bf16.mxu0 0
    %374 = vmatpush1.bf16.msra.mxu0 %v284
    %375 = vmatprep.subr.bf16.mxu0 0
    %376 = vmatpush1.bf16.msra.mxu0 %v285
    %377 = vmatprep.subr.bf16.mxu0 0
    %378 = vmatpush1.bf16.msra.mxu0 %v286
    %379 = vmatprep.subr.bf16.mxu0 0
    %380 = vmatpush1.bf16.msra.mxu0 %v287
    %381 = vmatprep.subr.bf16.mxu0 0
    %382 = vmatpush1.bf16.msra.mxu0 %v288
    %383 = vmatprep.subr.bf16.mxu0 0
    %384 = vmatpush1.bf16.msra.mxu0 %v289
    %385 = vmatprep.subr.bf16.mxu0 0
    %386 = vmatpush1.bf16.msra.mxu0 %v290
    %387 = vmatprep.subr.bf16.mxu0 0
    %388 = vmatpush1.bf16.msra.mxu0 %v291
    %389 = vmatprep.subr.bf16.mxu0 0
    %390 = vmatpush1.bf16.msra.mxu0 %v292
    %391 = vmatprep.subr.bf16.mxu0 0
    %392 = vmatpush1.bf16.msra.mxu0 %v293
    %393 = vmatprep.subr.bf16.mxu0 0
    %394 = vmatpush1.bf16.msra.mxu0 %v294
    %395 = vmatprep.subr.bf16.mxu0 0
    %396 = vmatpush1.bf16.msra.mxu0 %v295
    %397 = vmatprep.subr.bf16.mxu0 0
    %398 = vmatpush1.bf16.msra.mxu0 %v296
    %399 = vmatprep.subr.bf16.mxu0 0
    %400 = vmatpush1.bf16.msra.mxu0 %v297
    %401 = vmatprep.subr.bf16.mxu0 0
    %402 = vmatpush1.bf16.msra.mxu0 %v298
    %403 = vmatprep.mubr.bf16.mxu0 %v74
    %404 = vmatmul.mubr.bf16.gmra.mrb[0].mxu0 %v73
    %v405 = vpop.f32.mrb[0].mxu0
    %v406 = vadd.f32 %v366, %v405
    %v407 = vpop.f32.mrb[0].mxu0
    %v408 = vpop.f32.mrb[0].mxu0
    %v409 = vpop.f32.mrb[0].mxu0
    %410 = vdwg.mxu0
    %v411 = vrot.slane %v406, 4
    %v412 = vadd.f32 %v406, %v411
    %v413 = vrot.slane %v412, 2
    %v414 = vadd.f32 %v412, %v413
    %v415 = vrot.slane %v414, 1
    %v416 = vadd.f32 %v414, %v415
    %v417 = vrcp.pop 8.0
    %v418 = vmul.f32 %v416, %v417
    %v419 = vsub.f32 %v406, %v418
    %v420 = vmul.f32 %v419, %v419
    %v421 = vrot.slane %v420, 4
    %v422 = vadd.f32 %v420, %v421
    %v423 = vrot.slane %v422, 2
    %v424 = vadd.f32 %v422, %v423
    %v425 = vrot.slane %v424, 1
    %v426 = vadd.f32 %v424, %v425
    %v427 = vmul.f32 %v426, %v417
    %v428 = vld [vmem:[%s2] sm:$0x1]
    %v429 = vadd.f32 %v427, 1e-05
    %v430 = vrsqrt.pop %v429
    %v431 = vmul.f32 %v428, %v430
    %v432 = vld [vmem:[%s3] sm:$0x1]
    %v433 = vmul.f32 %v418, %v431
    %v434 = vsub.f32 %v432, %v433
    %v436 = vlaneseq
    %v437 = vshrl.u32 %v436, 7
    %v438 = vsub.s32 0, %v437
    %v439 = vrot.slane %v431, %v438
    %v441 = vmul.f32 %v406, %v439
    %v443 = vlaneseq
    %v444 = vshrl.u32 %v443, 7
    %v445 = vsub.s32 0, %v444
    %v446 = vrot.slane %v434, %v445
    %v448 = vadd.f32 %v441, %v446
    %v449 = vsub.f32 0.0, %v448
    %v450 = vmul.f32 %v449, 1.442695
    %v451 = vpow.pop %v450
    %v452 = vadd.f32 %v451, 1.0
    %v453 = vrcp.pop %v452
    %v454 = vmul.f32 %v448, %v453
    %v455 = vpack.c.bf16 %v454, %v454
    %v456 = vld [vmem:[#allocation7] sm:$0xff]
    %v457 = vld [vmem:[#allocation7 + $0x8] sm:$0xff]
    %v458 = vld [vmem:[#allocation7 + $0x10] sm:$0xff]
    %v459 = vld [vmem:[#allocation7 + $0x18] sm:$0xff]
    %v460 = vld [vmem:[#allocation7 + $0x20] sm:$0xff]
    %v461 = vld [vmem:[#allocation7 + $0x28] sm:$0xff]
    %v462 = vld [vmem:[#allocation7 + $0x30] sm:$0xff]
    %v463 = vld [vmem:[#allocation7 + $0x38] sm:$0xff]
    %v464 = vld [vmem:[#allocation7 + $0x40] sm:$0xff]
    %v465 = vld [vmem:[#allocation7 + $0x48] sm:$0xff]
    %v466 = vld [vmem:[#allocation7 + $0x50] sm:$0xff]
    %v467 = vld [vmem:[#allocation7 + $0x58] sm:$0xff]
    %v468 = vld [vmem:[#allocation7 + $0x60] sm:$0xff]
    %v469 = vld [vmem:[#allocation7 + $0x68] sm:$0xff]
    %v470 = vld [vmem:[#allocation7 + $0x70] sm:$0xff]
    %v471 = vld [vmem:[#allocation7 + $0x78] sm:$0xff]
    %v472 = vld [vmem:[#allocation7 + $0x80] sm:$0xff]
    %v473 = vld [vmem:[#allocation7 + $0x88] sm:$0xff]
    %v474 = vld [vmem:[#allocation7 + $0x90] sm:$0xff]
    %v475 = vld [vmem:[#allocation7 + $0x98] sm:$0xff]
    %v476 = vld [vmem:[#allocation7 + $0xa0] sm:$0xff]
    %v477 = vld [vmem:[#allocation7 + $0xa8] sm:$0xff]
    %v478 = vld [vmem:[#allocation7 + $0xb0] sm:$0xff]
    %v479 = vld [vmem:[#allocation7 + $0xb8] sm:$0xff]
    %v480 = vld [vmem:[#allocation7 + $0xc0] sm:$0xff]
    %v481 = vld [vmem:[#allocation7 + $0xc8] sm:$0xff]
    %v482 = vld [vmem:[#allocation7 + $0xd0] sm:$0xff]
    %v483 = vld [vmem:[#allocation7 + $0xd8] sm:$0xff]
    %v484 = vld [vmem:[#allocation7 + $0xe0] sm:$0xff]
    %v485 = vld [vmem:[#allocation7 + $0xe8] sm:$0xff]
    %v486 = vld [vmem:[#allocation7 + $0xf0] sm:$0xff]
    %v487 = vld [vmem:[#allocation7 + $0xf8] sm:$0xff]
    %v520 = vunpack.c.l.b16 %v456
    %v521 = vunpack.c.h.b16 %v456
    %v522 = vunpack.c.l.b16 %v457
    %v523 = vunpack.c.h.b16 %v457
    %v524 = vunpack.c.l.b16 %v458
    %v525 = vunpack.c.h.b16 %v458
    %v526 = vunpack.c.l.b16 %v459
    %v527 = vunpack.c.h.b16 %v459
    %v528 = vunpack.c.l.b16 %v460
    %v529 = vunpack.c.h.b16 %v460
    %v530 = vunpack.c.l.b16 %v461
    %v531 = vunpack.c.h.b16 %v461
    %v532 = vunpack.c.l.b16 %v462
    %v533 = vunpack.c.h.b16 %v462
    %v534 = vunpack.c.l.b16 %v463
    %v535 = vunpack.c.h.b16 %v463
    %v536 = vunpack.c.l.b16 %v464
    %v537 = vunpack.c.h.b16 %v464
    %v538 = vunpack.c.l.b16 %v465
    %v539 = vunpack.c.h.b16 %v465
    %v540 = vunpack.c.l.b16 %v466
    %v541 = vunpack.c.h.b16 %v466
    %v542 = vunpack.c.l.b16 %v467
    %v543 = vunpack.c.h.b16 %v467
    %v544 = vunpack.c.l.b16 %v468
    %v545 = vunpack.c.h.b16 %v468
    %v546 = vunpack.c.l.b16 %v469
    %v547 = vunpack.c.h.b16 %v469
    %v548 = vunpack.c.l.b16 %v470
    %v549 = vunpack.c.h.b16 %v470
    %v550 = vunpack.c.l.b16 %v471
    %v551 = vunpack.c.h.b16 %v471
    %v552 = vunpack.c.l.b16 %v472
    %v553 = vunpack.c.h.b16 %v472
    %v554 = vunpack.c.l.b16 %v473
    %v555 = vunpack.c.h.b16 %v473
    %v556 = vunpack.c.l.b16 %v474
    %v557 = vunpack.c.h.b16 %v474
    %v558 = vunpack.c.l.b16 %v475
    %v559 = vunpack.c.h.b16 %v475
    %v560 = vunpack.c.l.b16 %v476
    %v561 = vunpack.c.h.b16 %v476
    %v562 = vunpack.c.l.b16 %v477
    %v563 = vunpack.c.h.b16 %v477
    %v564 = vunpack.c.l.b16 %v478
    %v565 = vunpack.c.h.b16 %v478
    %v566 = vunpack.c.l.b16 %v479
    %v567 = vunpack.c.h.b16 %v479
    %v568 = vunpack.c.l.b16 %v480
    %v569 = vunpack.c.h.b16 %v480
    %v570 = vunpack.c.l.b16 %v481
    %v571 = vunpack.c.h.b16 %v481
    %v572 = vunpack.c.l.b16 %v482
    %v573 = vunpack.c.h.b16 %v482
    %v574 = vunpack.c.l.b16 %v483
    %v575 = vunpack.c.h.b16 %v483
    %v576 = vunpack.c.l.b16 %v484
    %v577 = vunpack.c.h.b16 %v484
    %v578 = vunpack.c.l.b16 %v485
    %v579 = vunpack.c.h.b16 %v485
    %v580 = vunpack.c.l.b16 %v486
    %v581 = vunpack.c.h.b16 %v486
    %v582 = vunpack.c.l.b16 %v487
    %v583 = vunpack.c.h.b16 %v487
    %v584 = vpack.c.b16 %v524, %v520
    %v585 = vpack.c.b16 %v525, %v521
    %v586 = vpack.c.b16 %v526, %v522
    %v587 = vpack.c.b16 %v527, %v523
    %v588 = vpack.c.b16 %v532, %v528
    %v589 = vpack.c.b16 %v533, %v529
    %v590 = vpack.c.b16 %v534, %v530
    %v591 = vpack.c.b16 %v535, %v531
    %v592 = vpack.c.b16 %v540, %v536
    %v593 = vpack.c.b16 %v541, %v537
    %v594 = vpack.c.b16 %v542, %v538
    %v595 = vpack.c.b16 %v543, %v539
    %v596 = vpack.c.b16 %v548, %v544
    %v597 = vpack.c.b16 %v549, %v545
    %v598 = vpack.c.b16 %v550, %v546
    %v599 = vpack.c.b16 %v551, %v547
    %v600 = vpack.c.b16 %v556, %v552
    %v601 = vpack.c.b16 %v557, %v553
    %v602 = vpack.c.b16 %v558, %v554
    %v603 = vpack.c.b16 %v559, %v555
    %v604 = vpack.c.b16 %v564, %v560
    %v605 = vpack.c.b16 %v565, %v561
    %v606 = vpack.c.b16 %v566, %v562
    %v607 = vpack.c.b16 %v567, %v563
    %v608 = vpack.c.b16 %v572, %v568
    %v609 = vpack.c.b16 %v573, %v569
    %v610 = vpack.c.b16 %v574, %v570
    %v611 = vpack.c.b16 %v575, %v571
    %v612 = vpack.c.b16 %v580, %v576
    %v613 = vpack.c.b16 %v581, %v577
    %v614 = vpack.c.b16 %v582, %v578
    %v615 = vpack.c.b16 %v583, %v579
    %648 = vmatprep.subr.bf16.mxu0 %v585
    %649 = vmatpush1.bf16.msra.mxu0 %v584
    %650 = vmatprep.subr.bf16.mxu0 %v589
    %651 = vmatpush1.bf16.msra.mxu0 %v588
    %652 = vmatprep.subr.bf16.mxu0 %v593
    %653 = vmatpush1.bf16.msra.mxu0 %v592
    %654 = vmatprep.subr.bf16.mxu0 %v597
    %655 = vmatpush1.bf16.msra.mxu0 %v596
    %656 = vmatprep.subr.bf16.mxu0 %v601
    %657 = vmatpush1.bf16.msra.mxu0 %v600
    %658 = vmatprep.subr.bf16.mxu0 %v605
    %659 = vmatpush1.bf16.msra.mxu0 %v604
    %660 = vmatprep.subr.bf16.mxu0 %v609
    %661 = vmatpush1.bf16.msra.mxu0 %v608
    %662 = vmatprep.subr.bf16.mxu0 %v613
    %663 = vmatpush1.bf16.msra.mxu0 %v612
    %664 = vmatprep.subr.bf16.mxu0 0
    %665 = vmatpush1.bf16.msra.mxu0 0
    %666 = vmatprep.subr.bf16.mxu0 0
    %667 = vmatpush1.bf16.msra.mxu0 0
    %668 = vmatprep.subr.bf16.mxu0 0
    %669 = vmatpush1.bf16.msra.mxu0 0
    %670 = vmatprep.subr.bf16.mxu0 0
    %671 = vmatpush1.bf16.msra.mxu0 0
    %672 = vmatprep.subr.bf16.mxu0 0
    %673 = vmatpush1.bf16.msra.mxu0 0
    %674 = vmatprep.subr.bf16.mxu0 0
    %675 = vmatpush1.bf16.msra.mxu0 0
    %676 = vmatprep.subr.bf16.mxu0 0
    %677 = vmatpush1.bf16.msra.mxu0 0
    %678 = vmatprep.subr.bf16.mxu0 0
    %679 = vmatpush1.bf16.msra.mxu0 0
    %680 = vmatprep.mubr.bf16.mxu0 0
    %681 = vmatmul.mubr.bf16.gmra.mrb[0].mxu0 %v455
    %v682 = vpop.f32.mrb[0].mxu0
    %v683 = vadd.f32 0.0, %v682
    %v684 = vpop.f32.mrb[0].mxu0
    %v685 = vadd.f32 0.0, %v684
    %v686 = vpop.f32.mrb[0].mxu0
    %v687 = vpop.f32.mrb[0].mxu0
    %688 = vdwg.mxu0
    %689 = vmatprep.subr.bf16.mxu0 %v587
    %690 = vmatpush1.bf16.msra.mxu0 %v586
    %691 = vmatprep.subr.bf16.mxu0 %v591
    %692 = vmatpush1.bf16.msra.mxu0 %v590
    %693 = vmatprep.subr.bf16.mxu0 %v595
    %694 = vmatpush1.bf16.msra.mxu0 %v594
    %695 = vmatprep.subr.bf16.mxu0 %v599
    %696 = vmatpush1.bf16.msra.mxu0 %v598
    %697 = vmatprep.subr.bf16.mxu0 %v603
    %698 = vmatpush1.bf16.msra.mxu0 %v602
    %699 = vmatprep.subr.bf16.mxu0 %v607
    %700 = vmatpush1.bf16.msra.mxu0 %v606
    %701 = vmatprep.subr.bf16.mxu0 %v611
    %702 = vmatpush1.bf16.msra.mxu0 %v610
    %703 = vmatprep.subr.bf16.mxu0 %v615
    %704 = vmatpush1.bf16.msra.mxu0 %v614
    %705 = vmatprep.subr.bf16.mxu0 0
    %706 = vmatpush1.bf16.msra.mxu0 0
    %707 = vmatprep.subr.bf16.mxu0 0
    %708 = vmatpush1.bf16.msra.mxu0 0
    %709 = vmatprep.subr.bf16.mxu0 0
    %710 = vmatpush1.bf16.msra.mxu0 0
    %711 = vmatprep.subr.bf16.mxu0 0
    %712 = vmatpush1.bf16.msra.mxu0 0
    %713 = vmatprep.subr.bf16.mxu0 0
    %714 = vmatpush1.bf16.msra.mxu0 0
    %715 = vmatprep.subr.bf16.mxu0 0
    %716 = vmatpush1.bf16.msra.mxu0 0
    %717 = vmatprep.subr.bf16.mxu0 0
    %718 = vmatpush1.bf16.msra.mxu0 0
    %719 = vmatprep.subr.bf16.mxu0 0
    %720 = vmatpush1.bf16.msra.mxu0 0
    %721 = vmatprep.mubr.bf16.mxu0 0
    %722 = vmatmul.mubr.bf16.gmra.mrb[0].mxu0 %v455
    %v723 = vpop.f32.mrb[0].mxu0
    %v724 = vadd.f32 0.0, %v723
    %v725 = vpop.f32.mrb[0].mxu0
    %v726 = vadd.f32 0.0, %v725
    %v727 = vpop.f32.mrb[0].mxu0
    %v728 = vpop.f32.mrb[0].mxu0
    %729 = vdwg.mxu0
    %v730 = vrot.slane %v683, 4
    %v731 = vadd.f32 %v683, %v730
    %v732 = vrot.slane %v731, 2
    %v733 = vadd.f32 %v731, %v732
    %v734 = vrot.slane %v733, 1
    %v735 = vadd.f32 %v733, %v734
    %v736 = vrot.slane %v685, 4
    %v737 = vadd.f32 %v685, %v736
    %v738 = vrot.slane %v737, 2
    %v739 = vadd.f32 %v737, %v738
    %v740 = vrot.slane %v739, 1
    %v741 = vadd.f32 %v739, %v740
    %v742 = vrot.slane %v724, 4
    %v743 = vadd.f32 %v724, %v742
    %v744 = vrot.slane %v743, 2
    %v745 = vadd.f32 %v743, %v744
    %v746 = vrot.slane %v745, 1
    %v747 = vadd.f32 %v745, %v746
    %v748 = vrot.slane %v726, 4
    %v749 = vadd.f32 %v726, %v748
    %v750 = vrot.slane %v749, 2
    %v751 = vadd.f32 %v749, %v750
    %v752 = vrot.slane %v751, 1
    %v753 = vadd.f32 %v751, %v752
    %v754 = vmul.f32 %v735, %v417
    %v755 = vmul.f32 %v741, %v417
    %v756 = vmul.f32 %v747, %v417
    %v757 = vmul.f32 %v753, %v417
    %v758 = vsub.f32 %v683, %v754
    %v759 = vsub.f32 %v685, %v755
    %v760 = vsub.f32 %v724, %v756
    %v761 = vsub.f32 %v726, %v757
    %v762 = vmul.f32 %v758, %v758
    %v763 = vmul.f32 %v759, %v759
    %v764 = vmul.f32 %v760, %v760
    %v765 = vmul.f32 %v761, %v761
    %v766 = vrot.slane %v762, 4
    %v767 = vadd.f32 %v762, %v766
    %v768 = vrot.slane %v767, 2
    %v769 = vadd.f32 %v767, %v768
    %v770 = vrot.slane %v769, 1
    %v771 = vadd.f32 %v769, %v770
    %v772 = vrot.slane %v763, 4
    %v773 = vadd.f32 %v763, %v772
    %v774 = vrot.slane %v773, 2
    %v775 = vadd.f32 %v773, %v774
    %v776 = vrot.slane %v775, 1
    %v777 = vadd.f32 %v775, %v776
    %v778 = vrot.slane %v764, 4
    %v779 = vadd.f32 %v764, %v778
    %v780 = vrot.slane %v779, 2
    %v781 = vadd.f32 %v779, %v780
    %v782 = vrot.slane %v781, 1
    %v783 = vadd.f32 %v781, %v782
    %v784 = vrot.slane %v765, 4
    %v785 = vadd.f32 %v765, %v784
    %v786 = vrot.slane %v785, 2
    %v787 = vadd.f32 %v785, %v786
    %v788 = vrot.slane %v787, 1
    %v789 = vadd.f32 %v787, %v788
    %v790 = vmul.f32 %v771, %v417
    %v791 = vmul.f32 %v777, %v417
    %v792 = vmul.f32 %v783, %v417
    %v793 = vmul.f32 %v789, %v417
    %v794 = vld [vmem:[%s5] sm:$0xf]
    %v795 = vadd.f32 %v790, 1e-05
    %v796 = vadd.f32 %v791, 1e-05
    %v797 = vadd.f32 %v792, 1e-05
    %v798 = vadd.f32 %v793, 1e-05
    %v799 = vrsqrt.pop %v795
    %v800 = vrsqrt.pop %v796
    %v801 = vrsqrt.pop %v797
    %v802 = vrsqrt.pop %v798
    %v807 = vcombine.low %v799, %v800
    %v808 = vcombine.low %v801, %v802
    %v810 = vunpack.c.l.s4 1966171168
    %v811 = vunpack.c.0.s8 %v810
    %v812 = vlaneseq
    %v813 = vshrl.u32 %v812, 7
    %v814 = vsub.s32 %v811, %v813
    %v815 = vrot.slane %v807, %v814
    %v817 = vunpack.c.l.s4 1966171168
    %v818 = vunpack.c.0.s8 %v817
    %v819 = vlaneseq
    %v820 = vshrl.u32 %v819, 7
    %v821 = vsub.s32 %v818, %v820
    %v822 = vrot.slane %v808, %v821
    %v823 = vcombine.low %v815, %v822
    %v825 = vunpack.c.l.s4 1966171168
    %v826 = vunpack.c.0.s8 %v825
    %v827 = vlaneseq
    %v828 = vshrl.u32 %v827, 7
    %v829 = vsub.s32 %v826, %v828
    %v830 = vrot.slane %v823, %v829
    %v832 = vmul.f32 %v794, %v830
    %v833 = vld [vmem:[%s6] sm:$0xf]
    %v835 = vlaneseq
    %v836 = vshrl.u32 %v835, 7
    %v837 = vsub.s32 0, %v836
    %v838 = vrot.slane %v832, %v837
    %v839 = vlaneseq
    %v840 = vshrl.u32 %v839, 7
    %v841 = vsub.s32 1, %v840
    %v842 = vrot.slane %v832, %v841
    %v843 = vlaneseq
    %v844 = vshrl.u32 %v843, 7
    %v845 = vsub.s32 2, %v844
    %v846 = vrot.slane %v832, %v845
    %v847 = vlaneseq
    %v848 = vshrl.u32 %v847, 7
    %v849 = vsub.s32 3, %v848
    %v850 = vrot.slane %v832, %v849
    %v855 = vmul.f32 %v754, %v838
    %v856 = vmul.f32 %v755, %v842
    %v857 = vmul.f32 %v756, %v846
    %v858 = vmul.f32 %v757, %v850
    %v863 = vcombine.low %v855, %v856
    %v864 = vcombine.low %v857, %v858
    %v866 = vunpack.c.l.s4 1966171168
    %v867 = vunpack.c.0.s8 %v866
    %v868 = vlaneseq
    %v869 = vshrl.u32 %v868, 7
    %v870 = vsub.s32 %v867, %v869
    %v871 = vrot.slane %v863, %v870
    %v873 = vunpack.c.l.s4 1966171168
    %v874 = vunpack.c.0.s8 %v873
    %v875 = vlaneseq
    %v876 = vshrl.u32 %v875, 7
    %v877 = vsub.s32 %v874, %v876
    %v878 = vrot.slane %v864, %v877
    %v879 = vcombine.low %v871, %v878
    %v881 = vunpack.c.l.s4 1966171168
    %v882 = vunpack.c.0.s8 %v881
    %v883 = vlaneseq
    %v884 = vshrl.u32 %v883, 7
    %v885 = vsub.s32 %v882, %v884
    %v886 = vrot.slane %v879, %v885
    %v888 = vsub.f32 %v833, %v886
    %v889 = vmul.f32 %v683, %v838
    %v890 = vmul.f32 %v685, %v842
    %v891 = vmul.f32 %v724, %v846
    %v892 = vmul.f32 %v726, %v850
    %v894 = vlaneseq
    %v895 = vshrl.u32 %v894, 7
    %v896 = vsub.s32 0, %v895
    %v897 = vrot.slane %v888, %v896
    %v898 = vlaneseq
    %v899 = vshrl.u32 %v898, 7
    %v900 = vsub.s32 1, %v899
    %v901 = vrot.slane %v888, %v900
    %v902 = vlaneseq
    %v903 = vshrl.u32 %v902, 7
    %v904 = vsub.s32 2, %v903
    %v905 = vrot.slane %v888, %v904
    %v906 = vlaneseq
    %v907 = vshrl.u32 %v906, 7
    %v908 = vsub.s32 3, %v907
    %v909 = vrot.slane %v888, %v908
    %v914 = vadd.f32 %v889, %v897
    %v915 = vadd.f32 %v890, %v901
    %v916 = vadd.f32 %v891, %v905
    %v917 = vadd.f32 %v892, %v909
    %v918 = vsub.f32 0.0, %v914
    %v919 = vsub.f32 0.0, %v915
    %v920 = vsub.f32 0.0, %v916
    %v921 = vsub.f32 0.0, %v917
    %v922 = vmul.f32 %v918, 1.442695
    %v923 = vpow.pop %v922
    %v924 = vmul.f32 %v919, 1.442695
    %v925 = vpow.pop %v924
    %v926 = vmul.f32 %v920, 1.442695
    %v927 = vpow.pop %v926
    %v928 = vmul.f32 %v921, 1.442695
    %v929 = vpow.pop %v928
    %v930 = vadd.f32 %v923, 1.0
    %v931 = vadd.f32 %v925, 1.0
    %v932 = vadd.f32 %v927, 1.0
    %v933 = vadd.f32 %v929, 1.0
    %v934 = vrcp.pop %v930
    %v935 = vrcp.pop %v931
    %v936 = vrcp.pop %v932
    %v937 = vrcp.pop %v933
    %v938 = vmul.f32 %v67, %v934
    %v939 = vmul.f32 %v68, %v935
    %v940 = vmul.f32 %v69, %v936
    %v941 = vmul.f32 %v70, %v937
    %942 = vst [vmem:[#allocation8] sm:$0xff] %v938
    %943 = vst [vmem:[#allocation8 + $0x8] sm:$0xff] %v939
    %944 = vst [vmem:[#allocation8 + $0x10] sm:$0xff] %v940
    %945 = vst [vmem:[#allocation8 + $0x18] sm:$0xff] %v941
    // Predicated region
    $region42: #{attention_forward.1} parent=1 // pred_check
      _
    $region43: #{attention_forward.1} parent=1 // pred_check_branch
      %947 = sbr.rel (0) target = $region45
    $region44: #{attention_forward.1} parent=1 // pred_region
      %s949 = ssub.s32 512, 512
      %950 = vsyncadd [#allocation4], %s949
      %s952 = sshll.u32 [#allocation8], 4
      %s953 = int_to_ptr.vmem [resolvable:$true] %s952
      %955 = dma.vmem_to_hbm [thread:$0]  %s953, 512, %s7, [#allocation4]
    $region45: #{attention_forward.1} parent=1 // pred_fallthru
      _
    // Predicated region
    $region46: #{attention_forward.1} parent=1 // pred_check
      _
    $region47: #{attention_forward.1} parent=1 // pred_check_branch
      %957 = sbr.rel (0) target = $region49
    $region48: #{attention_forward.1} parent=1 // pred_region
      %958 = dma.done [#allocation4], 512
    $region49: #{attention_forward.1} parent=1 // pred_fallthru
      _
    %959 = vsyncpa [#allocation3], 1
    %960 = vsyncpa [#allocation6], 1
    %961 = vsyncpa [#allocation4], 1

</llo_original>
